<compile_context>
chip_gen: v5e
topology: v5e:2x2
jax: 0.10.0
libtpu: 0.0.40
codegen_flags: <defaults>
</compile_context>

<pallas_src>
import functools

import jax
import jax.numpy as jnp
from jax.experimental import pallas as pl
from jax.experimental.pallas import tpu as pltpu

LANE = 128
SUBLANE_GRANULE = 16  # bf16 input stream -> keep batch tiles multiples of 16


def _round_up(n, m):
    return ((n + m - 1) // m) * m


def _choose_tiling(batch, *, tile_b=None, max_tile=4096, granule=SUBLANE_GRANULE):
    """Pick (tile, padded_batch, n_tiles) with tile % granule == 0.

    Keeps padding overshoot small (< n_tiles * granule) and ensures at least
    two grid steps when the batch allows it so v7x's two TensorCores both get
    work under dimension_semantics=("parallel",).
    """
    b_g = _round_up(batch, granule)
    target = max_tile if tile_b is None else max(granule, _round_up(tile_b, granule))
    target = min(target, b_g)
    n_tiles = pl.cdiv(b_g, target)
    if n_tiles == 1 and b_g >= 2 * granule:
        n_tiles = 2
    tile = _round_up(pl.cdiv(b_g, n_tiles), granule)
    b_pad = tile * n_tiles
    return tile, b_pad, n_tiles


def _mlp_kernel(n_layers, out_dim, x_ref, w0_ref, w_ref, b_ref, out_ref):
    """Fused MLP over one batch tile.

    x_ref  : [tile, in_dim]        bf16 (true feature width, no lane padding)
    w0_ref : [in_dim, D]           bf16 (layer-0 weight)
    w_ref  : [n_layers-1, D, D]    bf16 (layers 1..n-1, zero-padded to D)
    b_ref  : [n_layers, 1, D]      f32  (all biases, zero-padded to D)
    out_ref: [tile, out_dim]       f32  (narrow writeback, no lane padding)
    """
    # Layer 0: bf16 x bf16 -> f32 accumulate; bias/ReLU in f32.
    z = jnp.dot(x_ref[...], w0_ref[...],
                preferred_element_type=jnp.float32) + b_ref[0]
    h = jnp.maximum(z, 0.0) if n_layers > 1 else z

    # Remaining layers (static unroll; only a handful of layers).
    for i in range(1, n_layers):
        z = jnp.dot(h.astype(jnp.bfloat16), w_ref[i - 1],
                    preferred_element_type=jnp.float32) + b_ref[i]
        h = jnp.maximum(z, 0.0) if i < n_layers - 1 else z

    # Only the real output columns leave VMEM.
    out_ref[...] = h[:, :out_dim].astype(out_ref.dtype)


def pack_mlp_params(weights, biases):
    """Pack per-layer params once (call at init time, reuse across forwards).

    weights[i]: [in_i, out_i] (transposed vs. torch), biases[i]: [out_i].
    """
    n_layers = len(weights)
    assert n_layers >= 2, "expected at least two Linear layers"
    in_dim = weights[0].shape[0]
    out_dim = weights[-1].shape[1]
    D = _round_up(max(w.shape[1] for w in weights), LANE)

    w0 = jnp.zeros((in_dim, D), jnp.float32)
    w0 = w0.at[:, : weights[0].shape[1]].set(weights[0].astype(jnp.float32))

    w_slab = jnp.zeros((n_layers - 1, D, D), jnp.float32)
    b_slab = jnp.zeros((n_layers, 1, D), jnp.float32)
    b_slab = b_slab.at[0, 0, : biases[0].shape[0]].set(biases[0].astype(jnp.float32))
    for i in range(1, n_layers):
        w, b = weights[i], biases[i]
        w_slab = w_slab.at[i - 1, : w.shape[0], : w.shape[1]].set(w.astype(jnp.float32))
        b_slab = b_slab.at[i, 0, : b.shape[0]].set(b.astype(jnp.float32))

    return dict(
        w0=w0.astype(jnp.bfloat16),
        w_slab=w_slab.astype(jnp.bfloat16),
        b_slab=b_slab,                 # biases stay f32 (elementwise path)
        n_layers=n_layers,
        in_dim=in_dim,
        out_dim=out_dim,
        D=D,
    )


def titanic_mlp_forward(x, packed, *, tile_b=None, max_tile=4096):
    """Fused MLP forward.  x: [B, layers[0]] -> [B, layers[-1]] (f32)."""
    n_layers = packed["n_layers"]
    in_dim = packed["in_dim"]
    out_dim = packed["out_dim"]
    D = packed["D"]
    w0, w_slab, b_slab = packed["w0"], packed["w_slab"], packed["b_slab"]

    batch = x.shape[0]
    assert x.shape[1] == in_dim

    tile, b_pad, n_tiles = _choose_tiling(batch, tile_b=tile_b, max_tile=max_tile)

    # Only row padding + bf16 cast; no lane padding, no full padded copy.
    x_p = x.astype(jnp.bfloat16)
    if b_pad != batch:
        x_p = jnp.pad(x_p, ((0, b_pad - batch), (0, 0)))

    kernel = functools.partial(_mlp_kernel, n_layers, out_dim)

    flops = 2 * b_pad * (in_dim * D + (n_layers - 1) * D * D)
    bytes_accessed = (x_p.size * 2 + w0.size * 2 + w_slab.size * 2
                      + b_slab.size * 4 + b_pad * out_dim * 4)
    cost = pl.CostEstimate(flops=flops, transcendentals=0,
                           bytes_accessed=bytes_accessed)

    out = pl.pallas_call(
        kernel,
        out_shape=jax.ShapeDtypeStruct((b_pad, out_dim), jnp.float32),
        grid_spec=pltpu.PrefetchScalarGridSpec(
            num_scalar_prefetch=0,
            grid=(n_tiles,),
            in_specs=[
                # streamed activations: one (tile, in_dim) block per step
                pl.BlockSpec((tile, in_dim), lambda i: (i, 0)),
                # parameters: constant index_map -> stay VMEM-resident
                pl.BlockSpec((in_dim, D), lambda i: (0, 0)),
                pl.BlockSpec((n_layers - 1, D, D), lambda i: (0, 0, 0)),
                pl.BlockSpec((n_layers, 1, D), lambda i: (0, 0, 0)),
            ],
            out_specs=pl.BlockSpec((tile, out_dim), lambda i: (i, 0)),
        ),
        compiler_params=pltpu.CompilerParams(
            dimension_semantics=("parallel",),   # batch tiles shard on v7x
            vmem_limit_bytes=32 * 1024 * 1024,
        ),
        cost_estimate=cost,
    )(x_p, w0, w_slab, b_slab)

    return out[:batch]


def init_linear_params(key, in_features, out_features):
    """Deterministic init matching torch.nn.Linear's default:
    U(-1/sqrt(fan_in), 1/sqrt(fan_in)) for both weight and bias."""
    kw, kb = jax.random.split(key)
    bound = 1.0 / jnp.sqrt(jnp.float32(in_features))
    # Stored as [in, out] (transposed vs. PyTorch) -> y = x @ W + b.
    w = jax.random.uniform(kw, (in_features, out_features), jnp.float32,
                           minval=-bound, maxval=bound)
    b = jax.random.uniform(kb, (out_features,), jnp.float32,
                           minval=-bound, maxval=bound)
    return w, b


def reference_forward_f32(x, weights, biases):
    h = x
    n = len(weights)
    for i in range(n):
        z = h @ weights[i] + biases[i]
        h = jnp.maximum(z, 0.0) if i < n - 1 else z
    return h


def reference_forward_bf16(x, weights, biases):
    """Reference with the same bf16-matmul / f32-accumulate recipe."""
    h = x.astype(jnp.float32)
    n = len(weights)
    for i in range(n):
        z = jnp.dot(h.astype(jnp.bfloat16), weights[i].astype(jnp.bfloat16),
                    preferred_element_type=jnp.float32) + biases[i]
        h = jnp.maximum(z, 0.0) if i < n - 1 else z
    return h


if __name__ == "__main__":
    # Small, Titanic-like MLP: 8 input features -> 32 -> 32 -> 1.
    layers = [8, 32, 32, 1]
    batch = 37          # ragged batch -> exercises row padding + 3 grid tiles

    root = jax.random.PRNGKey(0)
    keys = jax.random.split(root, len(layers))  # keys[0] data, rest per-layer

    x = jax.random.normal(keys[0], (batch, layers[0]), jnp.float32)

    weights, biases = [], []
    for i in range(len(layers) - 1):
        w, b = init_linear_params(keys[i + 1], layers[i], layers[i + 1])
        weights.append(w)
        biases.append(b)

    packed = pack_mlp_params(weights, biases)        # packed once, reused
    out = titanic_mlp_forward(x, packed, tile_b=16)  # small tile for the demo
    out = jax.block_until_ready(out)

    assert out.shape == (batch, layers[-1])

    ref_bf16 = reference_forward_bf16(x, weights, biases)
    ref_f32 = reference_forward_f32(x, weights, biases)
    assert jnp.allclose(out, ref_bf16, atol=1e-3, rtol=1e-3), \
        "mismatch vs. bf16-matmul reference"
    assert jnp.allclose(out, ref_f32, atol=1e-1, rtol=1e-1), \
        "mismatch vs. f32 reference"

    print("KERNEL_OK")
</pallas_src>

<mosaic_0001>
module attributes {stable_mosaic.version = 11 : i64} {
  func.func @_mlp_kernel(%arg0: i32, %arg1: memref<16x8xbf16, #tpu.memory_space<vmem>>, %arg2: memref<8x128xbf16, #tpu.memory_space<vmem>>, %arg3: memref<2x128x128xbf16, #tpu.memory_space<vmem>>, %arg4: memref<3x1x128xf32, #tpu.memory_space<vmem>>, %arg5: memref<16x1xf32, #tpu.memory_space<vmem>>) attributes {dimension_semantics = [#tpu.dimension_semantics<parallel>], iteration_bounds = array<i64: 3>, scalar_prefetch = 0 : i64, scratch_operands = 0 : i64, tpu.core_type = #tpu.core_type<tc>, window_params = [{transform_indices = @transform_0, window_bounds = array<i64: 16, 8>}, {pipeline_mode = #tpu.pipeline_mode<synchronous>, transform_indices = @transform_1, window_bounds = array<i64: 8, 128>}, {pipeline_mode = #tpu.pipeline_mode<synchronous>, transform_indices = @transform_2, window_bounds = array<i64: 2, 128, 128>}, {pipeline_mode = #tpu.pipeline_mode<synchronous>, transform_indices = @transform_3, window_bounds = array<i64: 3, 1, 128>}, {transform_indices = @transform_4, window_bounds = array<i64: 16, 1>}]} {
    %c0 = arith.constant 0 : index
    %c0_0 = arith.constant 0 : index
    %0 = vector.load %arg1[%c0, %c0_0] : memref<16x8xbf16, #tpu.memory_space<vmem>>, vector<16x8xbf16>
    %c0_1 = arith.constant 0 : index
    %c0_2 = arith.constant 0 : index
    %1 = vector.load %arg2[%c0_1, %c0_2] : memref<8x128xbf16, #tpu.memory_space<vmem>>, vector<8x128xbf16>
    %cst = arith.constant dense<0.000000e+00> : vector<16x128xf32>
    %2 = tpu.matmul %0, %1, %cst {dimension_numbers = #tpu.dot_dimension_numbers<[1], [0], [0], [1], [0, 0, 1, 1], [], []>} : vector<16x8xbf16>, vector<8x128xbf16>, vector<16x128xf32> -> vector<16x128xf32>
    %c0_3 = arith.constant 0 : index
    %c0_4 = arith.constant 0 : index
    %c0_5 = arith.constant 0 : index
    %3 = vector.load %arg4[%c0_3, %c0_4, %c0_5] : memref<3x1x128xf32, #tpu.memory_space<vmem>>, vector<1x1x128xf32>
    %4 = vector.shape_cast %3 : vector<1x1x128xf32> to vector<1x128xf32>
    %5 = vector.broadcast %4 : vector<1x128xf32> to vector<16x128xf32>
    %6 = arith.addf %2, %5 : vector<16x128xf32>
    %cst_6 = arith.constant 0.000000e+00 : f32
    %7 = vector.broadcast %cst_6 : f32 to vector<16x128xf32>
    %8 = arith.maximumf %6, %7 : vector<16x128xf32>
    %9 = arith.truncf %8 : vector<16x128xf32> to vector<16x128xbf16>
    %c0_7 = arith.constant 0 : index
    %c0_8 = arith.constant 0 : index
    %c0_9 = arith.constant 0 : index
    %10 = vector.load %arg3[%c0_7, %c0_8, %c0_9] : memref<2x128x128xbf16, #tpu.memory_space<vmem>>, vector<1x128x128xbf16>
    %11 = vector.shape_cast %10 : vector<1x128x128xbf16> to vector<128x128xbf16>
    %cst_10 = arith.constant dense<0.000000e+00> : vector<16x128xf32>
    %12 = tpu.matmul %9, %11, %cst_10 {dimension_numbers = #tpu.dot_dimension_numbers<[1], [0], [0], [1], [0, 0, 1, 1], [], []>} : vector<16x128xbf16>, vector<128x128xbf16>, vector<16x128xf32> -> vector<16x128xf32>
    %c1 = arith.constant 1 : index
    %c0_11 = arith.constant 0 : index
    %c0_12 = arith.constant 0 : index
    %13 = vector.load %arg4[%c1, %c0_11, %c0_12] : memref<3x1x128xf32, #tpu.memory_space<vmem>>, vector<1x1x128xf32>
    %14 = vector.shape_cast %13 : vector<1x1x128xf32> to vector<1x128xf32>
    %15 = vector.broadcast %14 : vector<1x128xf32> to vector<16x128xf32>
    %16 = arith.addf %12, %15 : vector<16x128xf32>
    %cst_13 = arith.constant 0.000000e+00 : f32
    %17 = vector.broadcast %cst_13 : f32 to vector<16x128xf32>
    %18 = arith.maximumf %16, %17 : vector<16x128xf32>
    %19 = arith.truncf %18 : vector<16x128xf32> to vector<16x128xbf16>
    %c1_14 = arith.constant 1 : index
    %c0_15 = arith.constant 0 : index
    %c0_16 = arith.constant 0 : index
    %20 = vector.load %arg3[%c1_14, %c0_15, %c0_16] : memref<2x128x128xbf16, #tpu.memory_space<vmem>>, vector<1x128x128xbf16>
    %21 = vector.shape_cast %20 : vector<1x128x128xbf16> to vector<128x128xbf16>
    %cst_17 = arith.constant dense<0.000000e+00> : vector<16x128xf32>
    %22 = tpu.matmul %19, %21, %cst_17 {dimension_numbers = #tpu.dot_dimension_numbers<[1], [0], [0], [1], [0, 0, 1, 1], [], []>} : vector<16x128xbf16>, vector<128x128xbf16>, vector<16x128xf32> -> vector<16x128xf32>
    %c2 = arith.constant 2 : index
    %c0_18 = arith.constant 0 : index
    %c0_19 = arith.constant 0 : index
    %23 = vector.load %arg4[%c2, %c0_18, %c0_19] : memref<3x1x128xf32, #tpu.memory_space<vmem>>, vector<1x1x128xf32>
    %24 = vector.shape_cast %23 : vector<1x1x128xf32> to vector<1x128xf32>
    %25 = vector.broadcast %24 : vector<1x128xf32> to vector<16x128xf32>
    %26 = arith.addf %22, %25 : vector<16x128xf32>
    %27 = vector.extract_strided_slice %26 {offsets = [0, 0], sizes = [16, 1], strides = [1, 1]} : vector<16x128xf32> to vector<16x1xf32>
    %c0_20 = arith.constant 0 : index
    %c0_21 = arith.constant 0 : index
    %28 = vector.load %arg5[%c0_20, %c0_21] : memref<16x1xf32, #tpu.memory_space<vmem>>, vector<16x1xf32>
    tpu.vector_store %arg5[%c0_20, %c0_21], %27 {strides = array<i32>} : memref<16x1xf32, #tpu.memory_space<vmem>>, vector<16x1xf32>,
    return
  }
  func.func @transform_0(%arg0: i32) -> (i32, i32) {
    %c0_i32 = arith.constant 0 : i32
    %c0_i32_0 = arith.constant 0 : i32
    return %arg0, %c0_i32 : i32, i32
  }
  func.func @transform_1(%arg0: i32) -> (i32, i32) {
    %c0_i32 = arith.constant 0 : i32
    %c0_i32_0 = arith.constant 0 : i32
    %c0_i32_1 = arith.constant 0 : i32
    return %c0_i32, %c0_i32_0 : i32, i32
  }
  func.func @transform_2(%arg0: i32) -> (i32, i32, i32) {
    %c0_i32 = arith.constant 0 : i32
    %c0_i32_0 = arith.constant 0 : i32
    %c0_i32_1 = arith.constant 0 : i32
    %c0_i32_2 = arith.constant 0 : i32
    return %c0_i32, %c0_i32_0, %c0_i32_1 : i32, i32, i32
  }
  func.func @transform_3(%arg0: i32) -> (i32, i32, i32) {
    %c0_i32 = arith.constant 0 : i32
    %c0_i32_0 = arith.constant 0 : i32
    %c0_i32_1 = arith.constant 0 : i32
    %c0_i32_2 = arith.constant 0 : i32
    return %c0_i32, %c0_i32_0, %c0_i32_1 : i32, i32, i32
  }
  func.func @transform_4(%arg0: i32) -> (i32, i32) {
    %c0_i32 = arith.constant 0 : i32
    %c0_i32_0 = arith.constant 0 : i32
    return %arg0, %c0_i32 : i32, i32
  }
}

</mosaic_0001>

<llo_original>
// kernel: tpu_custom_call.1
$region0: #{tpu_custom_call.1}
  #allocation0 [shape = 'u32[]', space=smem, size = 0x4, offset = 0x4, fixed_abs, tag = 'smem constant byte address 0x4 - core index']
  #allocation1 [shape = 'u32[72,128]{1,0:T(1,128)}', space=vmem, size = 0x9000, scoped, tag = 'internal scratch']
  %s0 = inlined_call_operand.vmem [shape: bf16[48,8], index: 0, kind: input, shape index: {}]
  %s1 = inlined_call_operand.vmem [shape: bf16[8,128], index: 1, kind: input, shape index: {}]
  %s2 = inlined_call_operand.hbm [shape: bf16[2,128,128], index: 2, kind: input, shape index: {}]
  %s3 = inlined_call_operand.vmem [shape: f32[3,1,128], index: 3, kind: input, shape index: {}]
  %s4 = inlined_call_operand.vmem [shape: f32[48,1], index: 4, kind: output, shape index: {}]
  %s5 = sld [smem:[#allocation0]]
  $region53: #{tpu_custom_call.1} parent=0
    _
  %s7 = ssub.s32 1, %s5
  %s8 = scalar_select 0, %s7, %s5
  $region1: #{tpu_custom_call.1} parent=0
    #allocation2 [shape = 'u8[65536]{0}', space=vmem, size = 0x10000, scoped, tag = 'input window, operand 2, single buffered']
    #allocation3 [shape = 's32[2]{0}', space=sflag, size = 0x8, scoped, tag = 'scoped memory for tpu_custom_call.1']
    %9 = vsyncpa [#allocation3], 0
    loop: start=0, step=1, limit=5
    $region2: #{tpu_custom_call.1} parent=1 // loop_pre_header
      _
    $region3: #{tpu_custom_call.1} parent=1 // loop_header
      %s11 = sphi 0, %s15
      %p12 = scmp.ge.s32.totalorder %s11, 5
      %s21 = sphi 0, %s23
      %s24 = sphi 0, %s21
      %s25 = sphi 0, %s24
      %s41 = sphi 0, %s25
      %s45 = sphi 0, %s45
      %s47 = sphi 0, %s45
      %s48 = sphi 0, %s47
      %s62 = sphi 0, %s48
      %s66 = sphi 0, %s66
      %s68 = sphi 0, %s66
      %s69 = sphi 0, %s68
      %s83 = sphi 0, %s69
      %s87 = sphi 0, %s87
      %s89 = sphi 0, %s87
      %s90 = sphi 0, %s89
      %s104 = sphi 0, %s90
      %s110 = sphi 0, %s112
      %s113 = sphi 0, %s110
      %s114 = sphi 0, %s113
      %s130 = sphi 0, %s114
    $region4: #{tpu_custom_call.1} parent=1 // loop_header_branch
      %14 = sbr.rel (%p12) target = $region8
    $region5: #{tpu_custom_call.1} parent=1 // loop_body
      %s16 = ssub.s32 %s11, 1
      %s17 = ssub.s32 %s11, 2
      %s18 = sadd.s32 %s11, 1
      %s19 = ssub.s32 %s11, %s18
      %p20 = scmp.eq.s32.totalorder %s19, 0
      %s22 = sadd.s32 %s21, 1
      %s23 = scalar_select %p20, %s21, %s22
      %p26 = pneg %p20
      %p27 = scmp.eq.s32.totalorder %s11, 2
      %p28 = por %p26, %p27
      %p29 = scmp.ne.s32.totalorder %s21, %s24
      %p30 = scmp.eq.s32.totalorder %s11, 0
      %p31 = por %p29, %p30
      %p32 = scmp.ne.s32.totalorder %s21, %s24
      %p33 = scmp.eq.s32.totalorder %s16, 2
      %p34 = por %p32, %p33
      %p35 = scmp.ne.s32.totalorder %s24, %s25
      %p36 = scmp.eq.s32.totalorder %s16, 0
      %p37 = por %p35, %p36
      %p38 = scmp.ne.s32.totalorder %s24, %s25
      %p39 = scmp.eq.s32.totalorder %s17, 2
      %p40 = por %p38, %p39
      %p42 = scmp.ne.s32.totalorder %s25, %s41
      %p43 = scmp.eq.s32.totalorder %s17, 0
      %p44 = por %p42, %p43
      %s46 = sadd.s32 %s45, 1
      %p49 = scmp.eq.s32.totalorder %s11, 2
      %p50 = scmp.ne.s32.totalorder %s45, %s47
      %p51 = scmp.eq.s32.totalorder %s11, 0
      %p52 = por %p50, %p51
      %p53 = scmp.ne.s32.totalorder %s45, %s47
      %p54 = scmp.eq.s32.totalorder %s16, 2
      %p55 = por %p53, %p54
      %p56 = scmp.ne.s32.totalorder %s47, %s48
      %p57 = scmp.eq.s32.totalorder %s16, 0
      %p58 = por %p56, %p57
      %p59 = scmp.ne.s32.totalorder %s47, %s48
      %p60 = scmp.eq.s32.totalorder %s17, 2
      %p61 = por %p59, %p60
      %p63 = scmp.ne.s32.totalorder %s48, %s62
      %p64 = scmp.eq.s32.totalorder %s17, 0
      %p65 = por %p63, %p64
      %s67 = sadd.s32 %s66, 1
      %p70 = scmp.eq.s32.totalorder %s11, 2
      %p71 = scmp.ne.s32.totalorder %s66, %s68
      %p72 = scmp.eq.s32.totalorder %s11, 0
      %p73 = por %p71, %p72
      %p74 = scmp.ne.s32.totalorder %s66, %s68
      %p75 = scmp.eq.s32.totalorder %s16, 2
      %p76 = por %p74, %p75
      %p77 = scmp.ne.s32.totalorder %s68, %s69
      %p78 = scmp.eq.s32.totalorder %s16, 0
      %p79 = por %p77, %p78
      %p80 = scmp.ne.s32.totalorder %s68, %s69
      %p81 = scmp.eq.s32.totalorder %s17, 2
      %p82 = por %p80, %p81
      %p84 = scmp.ne.s32.totalorder %s69, %s83
      %p85 = scmp.eq.s32.totalorder %s17, 0
      %p86 = por %p84, %p85
      %s88 = sadd.s32 %s87, 1
      %p91 = scmp.eq.s32.totalorder %s11, 2
      %p92 = scmp.ne.s32.totalorder %s87, %s89
      %p93 = scmp.eq.s32.totalorder %s11, 0
      %p94 = por %p92, %p93
      %p95 = scmp.ne.s32.totalorder %s87, %s89
      %p96 = scmp.eq.s32.totalorder %s16, 2
      %p97 = por %p95, %p96
      %p98 = scmp.ne.s32.totalorder %s89, %s90
      %p99 = scmp.eq.s32.totalorder %s16, 0
      %p100 = por %p98, %p99
      %p101 = scmp.ne.s32.totalorder %s89, %s90
      %p102 = scmp.eq.s32.totalorder %s17, 2
      %p103 = por %p101, %p102
      %p105 = scmp.ne.s32.totalorder %s90, %s104
      %p106 = scmp.eq.s32.totalorder %s17, 0
      %p107 = por %p105, %p106
      %s108 = ssub.s32 %s11, %s18
      %p109 = scmp.eq.s32.totalorder %s108, 0
      %s111 = sadd.s32 %s110, 1
      %s112 = scalar_select %p109, %s110, %s111
      %p115 = pneg %p109
      %p116 = scmp.eq.s32.totalorder %s11, 2
      %p117 = por %p115, %p116
      %p118 = scmp.ne.s32.totalorder %s110, %s113
      %p119 = scmp.eq.s32.totalorder %s11, 0
      %p120 = por %p118, %p119
      %p121 = scmp.ne.s32.totalorder %s110, %s113
      %p122 = scmp.eq.s32.totalorder %s16, 2
      %p123 = por %p121, %p122
      %p124 = scmp.ne.s32.totalorder %s113, %s114
      %p125 = scmp.eq.s32.totalorder %s16, 0
      %p126 = por %p124, %p125
      %p127 = scmp.ne.s32.totalorder %s113, %s114
      %p128 = scmp.eq.s32.totalorder %s17, 2
      %p129 = por %p127, %p128
      %p131 = scmp.ne.s32.totalorder %s114, %s130
      %p132 = scmp.eq.s32.totalorder %s17, 0
      %p133 = por %p131, %p132
      %p134 = scmp.le.s32.totalorder 1, %s11
      %p135 = scmp.lt.s32.totalorder %s11, 4
      %p136 = pnand %p134, %p135
      %p137 = pneg %p136
      // Predicated region
      $region9: #{tpu_custom_call.1} parent=5 // pred_check
        _
      $region10: #{tpu_custom_call.1} parent=5 // pred_check_branch
        %139 = sbr.rel (%p136) target = $region12
      $region11: #{tpu_custom_call.1} parent=5 // pred_region
        %s140 = ssub.s32 %s11, 1
        // Predicated region
        $region13: #{tpu_custom_call.1} parent=11 // pred_check
          %p141 = pneg %p58
        $region14: #{tpu_custom_call.1} parent=11 // pred_check_branch
          %143 = sbr.rel (%p141) target = $region16
        $region15: #{tpu_custom_call.1} parent=11 // pred_region
          _
        $region16: #{tpu_custom_call.1} parent=11 // pred_fallthru
          _
        // Predicated region
        $region17: #{tpu_custom_call.1} parent=11 // pred_check
          %p144 = pneg %p79
        $region18: #{tpu_custom_call.1} parent=11 // pred_check_branch
          %146 = sbr.rel (%p144) target = $region20
        $region19: #{tpu_custom_call.1} parent=11 // pred_region
          %148 = vsyncadd [#allocation3], 0
          %s149 = sshll.u32 %s2, 4
          %s150 = int_to_ptr.hbm [resolvable:$true] %s149
          %s151 = sshll.u32 [#allocation2], 4
          %s152 = int_to_ptr.vmem [resolvable:$true] %s151
          %157 = dma.hbm_to_vmem [thread:$0]  %s150, 2048, %s152, [#allocation3], 64, 64, 4
        $region20: #{tpu_custom_call.1} parent=11 // pred_fallthru
          _
        // Predicated region
        $region21: #{tpu_custom_call.1} parent=11 // pred_check
          %p158 = pneg %p100
        $region22: #{tpu_custom_call.1} parent=11 // pred_check_branch
          %160 = sbr.rel (%p158) target = $region24
        $region23: #{tpu_custom_call.1} parent=11 // pred_region
          _
        $region24: #{tpu_custom_call.1} parent=11 // pred_fallthru
          _
      $region12: #{tpu_custom_call.1} parent=5 // pred_fallthru
        _
      %p161 = scmp.lt.s32.totalorder %s11, 3
      // Predicated region
      $region25: #{tpu_custom_call.1} parent=5 // pred_check
        %p162 = pneg %p161
      $region26: #{tpu_custom_call.1} parent=5 // pred_check_branch
        %164 = sbr.rel (%p162) target = $region28
      $region27: #{tpu_custom_call.1} parent=5 // pred_region
        // Predicated region
        $region29: #{tpu_custom_call.1} parent=27 // pred_check
          %p165 = pneg %p31
        $region30: #{tpu_custom_call.1} parent=27 // pred_check_branch
          %167 = sbr.rel (%p165) target = $region32
        $region31: #{tpu_custom_call.1} parent=27 // pred_region
          %s168 = smul.u32 2, %s11
          %p169 = scmp.lt.s32.totalorder %s168, 5
          %s170 = scalar_select %p169, %s168, 5
          %s171 = smul.addr %s170, 4
          %s172 = scalar_lea.vmem %s0, %s171
          %s173 = smul.u32 2, %s11
        $region32: #{tpu_custom_call.1} parent=27 // pred_fallthru
          _
      $region28: #{tpu_custom_call.1} parent=5 // pred_fallthru
        _
      %p174 = scmp.le.s32.totalorder 1, %s11
      %p175 = scmp.lt.s32.totalorder %s11, 4
      %p176 = pnand %p174, %p175
      %p177 = pneg %p176
      // Predicated region
      $region33: #{tpu_custom_call.1} parent=5 // pred_check
        _
      $region34: #{tpu_custom_call.1} parent=5 // pred_check_branch
        %179 = sbr.rel (%p176) target = $region36
      $region35: #{tpu_custom_call.1} parent=5 // pred_region
        %s180 = ssub.s32 %s11, 1
        // Predicated region
        $region37: #{tpu_custom_call.1} parent=35 // pred_check
          %p181 = pneg %p79
        $region38: #{tpu_custom_call.1} parent=35 // pred_check_branch
          %183 = sbr.rel (%p181) target = $region40
        $region39: #{tpu_custom_call.1} parent=35 // pred_region
          %185 = dma.done [#allocation3], 2048
        $region40: #{tpu_custom_call.1} parent=35 // pred_fallthru
          _
        %s186 = smul.u32 2, %s16
        %p187 = scmp.lt.s32.totalorder %s186, 5
        %s188 = scalar_select %p187, %s186, 5
        %s189 = smul.addr %s188, 4
        %s190 = scalar_lea.vmem %s0, %s189
        %p191 = pneg %p37
        %p192 = pneg %p34
        %p193 = pneg %p58
        %p194 = pneg %p55
        %p195 = pneg %p79
        %p196 = pneg %p76
        %p197 = pneg %p100
        %p198 = pneg %p97
        %p199 = pneg %p126
        %p200 = pneg %p123
        %s201 = smul.u32 2, %s16
        %p202 = scmp.lt.s32.totalorder %s201, 5
        %s203 = scalar_select %p202, %s201, 5
        %s204 = smul.addr %s203, 8
        %s205 = scalar_lea.vmem %s4, %s204
        %s206 = smul.u32 2, %s16
        %p207 = scmp.lt.s32.totalorder %s206, 5
        %s208 = scalar_select %p207, %s206, 5
        %s209 = smul.addr %s208, 4
        %s210 = scalar_lea.vmem %s0, %s209
        %s211 = smul.u32 2, %s16
        %s212 = smul.u32 2, %s16
        %p213 = scmp.lt.s32.totalorder %s212, 5
        %s214 = scalar_select %p213, %s212, 5
        %s215 = smul.addr %s214, 8
        %s216 = scalar_lea.vmem %s4, %s215
        %s217 = smul.u32 2, %s16
        %v219 = vld [vmem:[%s210] sm:$0xf]
        %v220 = vld [vmem:[%s210 + $0x4] sm:$0xf]
        %v221 = vld [vmem:[%s1] sm:$0xf]
        %v222 = vld [vmem:[%s3] sm:$0x1]
        %v224 = vperm.slane %v222, 0
        %v228 = vunpack.c.l.b16 %v219
        %v229 = vunpack.c.l.b16 %v220
        %v230 = vpack.c.b16 %v229, %v228
        %vm231 = vcmask 64512
        %v233 = vsel %vm231, %v230, 0
        %vm235 = vcmask 1043456
        %v237 = vsel %vm235, %v221, 0
        %239 = vmatpush.bf16.msra.mxu0 0
        %240 = vmatpush.bf16.msra.mxu0 0
        %241 = vmatpush.bf16.msra.mxu0 0
        %242 = vmatpush.bf16.msra.mxu0 0
        %243 = vmatpush.bf16.msra.mxu0 0
        %244 = vmatpush.bf16.msra.mxu0 0
        %245 = vmatpush.bf16.msra.mxu0 0
        %246 = vmatpush.bf16.msra.mxu0 %v237
        %247 = vmatmul.bf16.gmra.mxu0 %v233
        %v248 = vpop.f32.mrf.mxu0
        %v249 = vadd.f32 %v224, %v248
        %v250 = vpop.f32.mrf.mxu0
        %v251 = vadd.f32 %v224, %v250
        %252 = vdwg.mxu0
        %v253 = vmax.f32 %v249, 0.0
        %v254 = vmax.f32 %v251, 0.0
        %v255 = vpack.c.bf16 %v254, %v253
        %v256 = vld [vmem:[#allocation2] sm:$0xf]
        %v257 = vld [vmem:[#allocation2 + $0x4] sm:$0xf]
        %v258 = vld [vmem:[#allocation2 + $0x8] sm:$0xf]
        %v259 = vld [vmem:[#allocation2 + $0xc] sm:$0xf]
        %v260 = vld [vmem:[#allocation2 + $0x10] sm:$0xf]
        %v261 = vld [vmem:[#allocation2 + $0x14] sm:$0xf]
        %v262 = vld [vmem:[#allocation2 + $0x18] sm:$0xf]
        %v263 = vld [vmem:[#allocation2 + $0x1c] sm:$0xf]
        %v264 = vld [vmem:[#allocation2 + $0x20] sm:$0xf]
        %v265 = vld [vmem:[#allocation2 + $0x24] sm:$0xf]
        %v266 = vld [vmem:[#allocation2 + $0x28] sm:$0xf]
        %v267 = vld [vmem:[#allocation2 + $0x2c] sm:$0xf]
        %v268 = vld [vmem:[#allocation2 + $0x30] sm:$0xf]
        %v269 = vld [vmem:[#allocation2 + $0x34] sm:$0xf]
        %v270 = vld [vmem:[#allocation2 + $0x38] sm:$0xf]
        %v271 = vld [vmem:[#allocation2 + $0x3c] sm:$0xf]
        %s272 = scalar_lea.vmem %s3, 1
        %v273 = vld [vmem:[%s272] sm:$0x1]
        %v275 = vperm.slane %v273, 0
        %v293 = vunpack.c.l.b16 %v256
        %v294 = vunpack.c.l.b16 %v257
        %v295 = vunpack.c.l.b16 %v258
        %v296 = vunpack.c.l.b16 %v259
        %v297 = vunpack.c.l.b16 %v260
        %v298 = vunpack.c.l.b16 %v261
        %v299 = vunpack.c.l.b16 %v262
        %v300 = vunpack.c.l.b16 %v263
        %v301 = vunpack.c.l.b16 %v264
        %v302 = vunpack.c.l.b16 %v265
        %v303 = vunpack.c.l.b16 %v266
        %v304 = vunpack.c.l.b16 %v267
        %v305 = vunpack.c.l.b16 %v268
        %v306 = vunpack.c.l.b16 %v269
        %v307 = vunpack.c.l.b16 %v270
        %v308 = vunpack.c.l.b16 %v271
        %v309 = vpack.c.b16 %v294, %v293
        %v310 = vpack.c.b16 %v296, %v295
        %v311 = vpack.c.b16 %v298, %v297
        %v312 = vpack.c.b16 %v300, %v299
        %v313 = vpack.c.b16 %v302, %v301
        %v314 = vpack.c.b16 %v304, %v303
        %v315 = vpack.c.b16 %v306, %v305
        %v316 = vpack.c.b16 %v308, %v307
        %325 = vmatpush.bf16.msra.mxu0 %v316
        %326 = vmatpush.bf16.msra.mxu0 %v315
        %327 = vmatpush.bf16.msra.mxu0 %v314
        %328 = vmatpush.bf16.msra.mxu0 %v313
        %329 = vmatpush.bf16.msra.mxu0 %v312
        %330 = vmatpush.bf16.msra.mxu0 %v311
        %331 = vmatpush.bf16.msra.mxu0 %v310
        %332 = vmatpush.bf16.msra.mxu0 %v309
        %333 = vmatmul.bf16.gmra.mxu0 %v255
        %v334 = vpop.f32.mrf.mxu0
        %v335 = vadd.f32 %v275, %v334
        %v336 = vpop.f32.mrf.mxu0
        %v337 = vadd.f32 %v275, %v336
        %338 = vdwg.mxu0
        %v339 = vmax.f32 %v335, 0.0
        %v340 = vmax.f32 %v337, 0.0
        %v341 = vpack.c.bf16 %v340, %v339
        %s342 = scalar_lea.vmem [#allocation2], 64
        %v343 = vld [vmem:[%s342] sm:$0xf]
        %v344 = vld [vmem:[%s342 + $0x4] sm:$0xf]
        %v345 = vld [vmem:[%s342 + $0x8] sm:$0xf]
        %v346 = vld [vmem:[%s342 + $0xc] sm:$0xf]
        %v347 = vld [vmem:[%s342 + $0x10] sm:$0xf]
        %v348 = vld [vmem:[%s342 + $0x14] sm:$0xf]
        %v349 = vld [vmem:[%s342 + $0x18] sm:$0xf]
        %v350 = vld [vmem:[%s342 + $0x1c] sm:$0xf]
        %v351 = vld [vmem:[%s342 + $0x20] sm:$0xf]
        %v352 = vld [vmem:[%s342 + $0x24] sm:$0xf]
        %v353 = vld [vmem:[%s342 + $0x28] sm:$0xf]
        %v354 = vld [vmem:[%s342 + $0x2c] sm:$0xf]
        %v355 = vld [vmem:[%s342 + $0x30] sm:$0xf]
        %v356 = vld [vmem:[%s342 + $0x34] sm:$0xf]
        %v357 = vld [vmem:[%s342 + $0x38] sm:$0xf]
        %v358 = vld [vmem:[%s342 + $0x3c] sm:$0xf]
        %s359 = scalar_lea.vmem %s3, 2
        %v360 = vld [vmem:[%s359] sm:$0x1]
        %v362 = vperm.slane %v360, 0
        %v380 = vunpack.c.l.b16 %v343
        %v381 = vunpack.c.l.b16 %v344
        %v382 = vunpack.c.l.b16 %v345
        %v383 = vunpack.c.l.b16 %v346
        %v384 = vunpack.c.l.b16 %v347
        %v385 = vunpack.c.l.b16 %v348
        %v386 = vunpack.c.l.b16 %v349
        %v387 = vunpack.c.l.b16 %v350
        %v388 = vunpack.c.l.b16 %v351
        %v389 = vunpack.c.l.b16 %v352
        %v390 = vunpack.c.l.b16 %v353
        %v391 = vunpack.c.l.b16 %v354
        %v392 = vunpack.c.l.b16 %v355
        %v393 = vunpack.c.l.b16 %v356
        %v394 = vunpack.c.l.b16 %v357
        %v395 = vunpack.c.l.b16 %v358
        %v396 = vpack.c.b16 %v381, %v380
        %v397 = vpack.c.b16 %v383, %v382
        %v398 = vpack.c.b16 %v385, %v384
        %v399 = vpack.c.b16 %v387, %v386
        %v400 = vpack.c.b16 %v389, %v388
        %v401 = vpack.c.b16 %v391, %v390
        %v402 = vpack.c.b16 %v393, %v392
        %v403 = vpack.c.b16 %v395, %v394
        %412 = vmatpush.bf16.msra.mxu0 %v403
        %413 = vmatpush.bf16.msra.mxu0 %v402
        %414 = vmatpush.bf16.msra.mxu0 %v401
        %415 = vmatpush.bf16.msra.mxu0 %v400
        %416 = vmatpush.bf16.msra.mxu0 %v399
        %417 = vmatpush.bf16.msra.mxu0 %v398
        %418 = vmatpush.bf16.msra.mxu0 %v397
        %419 = vmatpush.bf16.msra.mxu0 %v396
        %420 = vmatmul.bf16.gmra.mxu0 %v341
        %v421 = vpop.f32.mrf.mxu0
        %v422 = vadd.f32 %v362, %v421
        %v423 = vpop.f32.mrf.mxu0
        %v424 = vadd.f32 %v362, %v423
        %425 = vdwg.mxu0
        %vm426 = vcmask 7168
        %427 = vst.msk [vmem:[%s216] sm:$0xff] %vm426, %v422
        %428 = vst.msk [vmem:[%s216 + $0x8] sm:$0xff] %vm426, %v424
        %s429 = smul.u32 2, %s16
        %p430 = scmp.lt.s32.totalorder %s429, 5
        %s431 = scalar_select %p430, %s429, 5
        %s432 = smul.addr %s431, 8
        %s433 = scalar_lea.vmem %s4, %s432
        // Predicated region
        $region41: #{tpu_custom_call.1} parent=35 // pred_check
          %p434 = pneg %p123
        $region42: #{tpu_custom_call.1} parent=35 // pred_check_branch
          %436 = sbr.rel (%p434) target = $region44
        $region43: #{tpu_custom_call.1} parent=35 // pred_region
          %s437 = smul.u32 2, %s16
        $region44: #{tpu_custom_call.1} parent=35 // pred_fallthru
          _
      $region36: #{tpu_custom_call.1} parent=5 // pred_fallthru
        _
      %p438 = scmp.le.s32.totalorder 2, %s11
      // Predicated region
      $region45: #{tpu_custom_call.1} parent=5 // pred_check
        %p439 = pneg %p438
      $region46: #{tpu_custom_call.1} parent=5 // pred_check_branch
        %441 = sbr.rel (%p439) target = $region48
      $region47: #{tpu_custom_call.1} parent=5 // pred_region
        %s442 = ssub.s32 %s11, 2
        // Predicated region
        $region49: #{tpu_custom_call.1} parent=47 // pred_check
          %p443 = pneg %p129
        $region50: #{tpu_custom_call.1} parent=47 // pred_check_branch
          %445 = sbr.rel (%p443) target = $region52
        $region51: #{tpu_custom_call.1} parent=47 // pred_region
          %s446 = smul.u32 2, %s17
          %p447 = scmp.lt.s32.totalorder %s446, 5
          %s448 = scalar_select %p447, %s446, 5
          %s449 = smul.addr %s448, 8
          %s450 = scalar_lea.vmem %s4, %s449
        $region52: #{tpu_custom_call.1} parent=47 // pred_fallthru
          _
      $region48: #{tpu_custom_call.1} parent=5 // pred_fallthru
        _
    $region6: #{tpu_custom_call.1} parent=1 // loop_footer
      %s15 = sadd.s32 1, %s11
    $region7: #{tpu_custom_call.1} parent=1 // loop_footer_branch
      %10 = sbr.rel target = $region3
    $region8: #{tpu_custom_call.1} parent=1 // loop_exit
      _
    %451 = vsyncpa [#allocation3], 1
    %s452 = scalar_lea.sflag [#allocation3], 1
    %453 = vsyncpa %s452, 1

</llo_original>
